<compile_context>
chip_gen: v6e
topology: v6e:2x2x1
jax: 0.10.0
libtpu: 0.0.40
codegen_flags: <defaults>
</compile_context>

<pallas_src>
import math
from functools import partial

import jax
import jax.numpy as jnp
from jax.experimental import pallas as pl
from jax.experimental.pallas import tpu as pltpu

EPS = 1e-5                      # PyTorch BatchNorm2d default eps
PSI = [5] * 100                 # => classifier1: 100 classes, classifier2: 500
LAYER_CFG = [(64, 3, 1), (128, 4, 2), (256, 6, 2), (512, 3, 2)]  # ResNet-50


def _round_up(x, m):
    return (x + m - 1) // m * m


# -----------------------------------------------------------------------------
# Tile-size selection helpers
# -----------------------------------------------------------------------------
def _pick_tile_m(M):
    """GEMM output-row tile.  Never below 128 so the weight matrix is streamed
    from HBM exactly once even at tiny batch sizes.  Returns (tm, padded_M)."""
    Mp = _round_up(M, 128)
    if Mp >= 512 and Mp % 256 == 0:
        return 256, Mp
    return 128, Mp


def _pick_tile_k(K):
    """Contraction tile.  Full K (single step) whenever it comfortably fits
    VMEM; otherwise the largest clean divisor (K=4608 -> 1152, 4 steps)."""
    if K <= 2304:
        return K
    for c in (1152, 1024, 768, 512, 384, 256, 128):
        if K % c == 0:
            return c
    return K


def _pick_tile_n(cout, nmt):
    tn = cout
    for c in (512, 256, 128):
        if cout % c == 0:
            tn = c
            break
    # v7x megacore: if there is only one M tile, keep >= 2 N blocks so both
    # TensorCores get work (only possible while tn/2 stays lane-aligned).
    if nmt == 1 and cout // tn == 1 and tn >= 256:
        tn //= 2
    return tn


def _pick_row_tile(rows, cols, max_elems=1 << 20):
    """Row tile for the mem-bound elementwise kernels (never needs padding)."""
    best = rows
    for c in (4096, 2048, 1024, 512, 256, 128, 64, 32, 16, 8):
        if rows % c == 0 and c * cols <= max_elems:
            best = c
            break
    # Prefer >= 2 grid blocks (v7x megacore) when it keeps sublane alignment.
    if best == rows and rows >= 16 and rows % 2 == 0 and (rows // 2) % 8 == 0:
        best = rows // 2
    return best


# -----------------------------------------------------------------------------
# Pallas kernels
# -----------------------------------------------------------------------------
def _write_stats(acc, stats_ref):
    col_sum = jnp.sum(acc, axis=0, keepdims=True)          # (1, tn) f32
    col_ssq = jnp.sum(acc * acc, axis=0, keepdims=True)    # (1, tn) f32
    row = jax.lax.broadcasted_iota(jnp.int32, stats_ref.shape, 0)
    stats_ref[...] = jnp.where(row == 0, col_sum,
                               jnp.where(row == 1, col_ssq, 0.0))


def _matmul_stats_kernel(a_ref, b_ref, o_ref, stats_ref, acc_ref):
    """out = A @ B (bf16 operands, f32 accumulation) with per-output-column
    sum / sum-of-squares emitted from the last-K epilogue (training-mode BN)."""
    @pl.when(pl.program_id(2) == 0)
    def _():
        acc_ref[...] = jnp.zeros_like(acc_ref)

    acc_ref[...] += jnp.dot(a_ref[...], b_ref[...],
                            preferred_element_type=jnp.float32)

    @pl.when(pl.program_id(2) == pl.num_programs(2) - 1)
    def _():
        acc = acc_ref[...]
        o_ref[...] = acc.astype(o_ref.dtype)
        _write_stats(acc, stats_ref)


def _matmul_stats_single_k_kernel(a_ref, b_ref, o_ref, stats_ref):
    """Single contraction step: no accumulator scratch round-trip needed."""
    acc = jnp.dot(a_ref[...], b_ref[...], preferred_element_type=jnp.float32)
    o_ref[...] = acc.astype(o_ref.dtype)
    _write_stats(acc, stats_ref)


def _bn_affine_kernel(*refs, relu, has_res):
    """y = x*scale + shift (+ residual) (+ ReLU).  scale/shift fold BN mean/var."""
    if has_res:
        x_ref, r_ref, sc_ref, sh_ref, o_ref = refs
    else:
        x_ref, sc_ref, sh_ref, o_ref = refs
        r_ref = None
    y = x_ref[...].astype(jnp.float32) * sc_ref[...] + sh_ref[...]
    if has_res:
        y = y + r_ref[...].astype(jnp.float32)
    if relu:
        y = jnp.maximum(y, 0.0)
    o_ref[...] = y.astype(o_ref.dtype)


def _dual_head_kernel(x_ref, w1_ref, b1_ref, w2_ref, b2_ref, o1_ref, o2_ref):
    """Both classifier heads (Linear + Softmax) in one launch, f32 throughout."""
    x = x_ref[...]
    for w_ref, b_ref, o_ref in ((w1_ref, b1_ref, o1_ref),
                                (w2_ref, b2_ref, o2_ref)):
        logits = jnp.dot(x, w_ref[...],
                         preferred_element_type=jnp.float32) + b_ref[...]
        m = jnp.max(logits, axis=1, keepdims=True)
        e = jnp.exp(logits - m)
        o_ref[...] = e / jnp.sum(e, axis=1, keepdims=True)


# -----------------------------------------------------------------------------
# Pallas wrappers
# -----------------------------------------------------------------------------
def matmul_bn_stats(a, b):
    """a:(M,K) bf16 @ b:(K,Cout) bf16 -> (out (M,Cout) bf16, col_sum, col_sumsq f32)."""
    M, K = a.shape
    K2, cout = b.shape
    assert K == K2
    tm, Mp = _pick_tile_m(M)
    tk = _pick_tile_k(K)
    nmt = Mp // tm
    tn = _pick_tile_n(cout, nmt)
    nkt = K // tk
    if Mp != M:
        a = jnp.pad(a, ((0, Mp - M), (0, 0)))   # zero rows: no effect on BN stats
    flops = 2 * Mp * cout * K
    bytes_acc = 2 * (Mp * K * (cout // tn) + K * cout + Mp * cout) + 4 * nmt * 8 * cout

    if nkt == 1:
        kernel, scratch = _matmul_stats_single_k_kernel, []
    else:
        kernel, scratch = _matmul_stats_kernel, [pltpu.VMEM((tm, tn), jnp.float32)]

    out, stats = pl.pallas_call(
        kernel,
        out_shape=(jax.ShapeDtypeStruct((Mp, cout), jnp.bfloat16),
                   jax.ShapeDtypeStruct((nmt * 8, cout), jnp.float32)),
        grid_spec=pltpu.PrefetchScalarGridSpec(
            num_scalar_prefetch=0,
            grid=(nmt, cout // tn, nkt),
            in_specs=[pl.BlockSpec((tm, tk), lambda i, j, k: (i, k)),
                      pl.BlockSpec((tk, tn), lambda i, j, k: (k, j))],
            out_specs=[pl.BlockSpec((tm, tn), lambda i, j, k: (i, j)),
                       pl.BlockSpec((8, tn), lambda i, j, k: (i, j))],
            scratch_shapes=scratch),
        compiler_params=pltpu.CompilerParams(
            dimension_semantics=("parallel", "parallel", "arbitrary")),
        cost_estimate=pl.CostEstimate(flops=flops, transcendentals=0,
                                      bytes_accessed=bytes_acc),
    )(a, b)

    stats = stats.reshape(nmt, 8, cout)
    col_sum = jnp.sum(stats[:, 0, :], axis=0)
    col_ssq = jnp.sum(stats[:, 1, :], axis=0)
    if Mp != M:
        out = out[:M]
    return out, col_sum, col_ssq


def bn_affine_apply(x2, scale, shift, relu, residual=None):
    """Tiled, fused BN-affine (+ residual add) (+ ReLU).  x2: (M, C) bf16."""
    M, C = x2.shape
    fold = 1
    if C < 128 and 128 % C == 0 and M % (128 // C) == 0:
        fold = 128 // C                  # lane-dense layout for C=64 stages
    Mf, Cf = M // fold, C * fold
    xf = x2.reshape(Mf, Cf)
    sc = jnp.tile(scale.astype(jnp.float32), fold).reshape(1, Cf)
    sh = jnp.tile(shift.astype(jnp.float32), fold).reshape(1, Cf)
    tr = _pick_row_tile(Mf, Cf)

    row_spec = pl.BlockSpec((tr, Cf), lambda i: (i, 0))
    vec_spec = pl.BlockSpec((1, Cf), lambda i: (0, 0))
    ins, in_specs = [xf], [row_spec]
    has_res = residual is not None
    if has_res:
        ins.append(residual.reshape(Mf, Cf))
        in_specs.append(row_spec)
    ins += [sc, sh]
    in_specs += [vec_spec, vec_spec]

    out = pl.pallas_call(
        partial(_bn_affine_kernel, relu=relu, has_res=has_res),
        out_shape=jax.ShapeDtypeStruct((Mf, Cf), jnp.bfloat16),
        grid_spec=pltpu.PrefetchScalarGridSpec(
            num_scalar_prefetch=0, grid=(Mf // tr,),
            in_specs=in_specs, out_specs=row_spec),
        compiler_params=pltpu.CompilerParams(dimension_semantics=("parallel",)),
    )(*ins)
    return out.reshape(M, C)


def _im2col(x_nhwc, kh, kw, stride, pad):
    # TODO(synk): implicit im2col via per-tap BlockSpec windows / manual DMA
    # would avoid materializing the kh*kw-inflated patch matrix in HBM.
    N, H, W, C = x_nhwc.shape
    Ho = (H + 2 * pad - kh) // stride + 1
    Wo = (W + 2 * pad - kw) // stride + 1
    xp = jnp.pad(x_nhwc, ((0, 0), (pad, pad), (pad, pad), (0, 0)))
    cols = []
    for i in range(kh):
        for j in range(kw):
            cols.append(xp[:, i:i + stride * Ho:stride,
                           j:j + stride * Wo:stride, :])
    patches = jnp.stack(cols, axis=3).reshape(N * Ho * Wo, kh * kw * C)
    return patches, Ho, Wo


def conv_bn_act(x, conv_p, bn_p, stride, pad, relu, residual=None):
    """Conv (MXU GEMM, bf16 operands, fused BN-stats epilogue) followed by the
    fused BN-affine (+ residual) (+ ReLU) kernel.  x: (N,H,W,Cin) bf16."""
    w2d, kh, kw = conv_p['w'], conv_p['kh'], conv_p['kw']
    N = x.shape[0]
    if kh == 1 and kw == 1:              # 1x1 conv: no im2col, no inflation
        if stride != 1:
            x = x[:, ::stride, ::stride, :]
        Ho, Wo = x.shape[1], x.shape[2]
        a2 = x.reshape(N * Ho * Wo, x.shape[3])
    else:
        a2, Ho, Wo = _im2col(x, kh, kw, stride, pad)

    out2, col_sum, col_ssq = matmul_bn_stats(a2, w2d)
    M, cout = out2.shape

    gamma, beta = bn_p
    # Training-mode BN (biased var).  NOTE: E[x^2]-E[x]^2 in f32 can lose
    # precision when |mean| >> std; acceptable here (fresh-init weights).
    mean = col_sum / M
    var = jnp.maximum(col_ssq / M - mean * mean, 0.0)
    scale = gamma * jax.lax.rsqrt(var + EPS)
    shift = beta - mean * scale

    res2 = None if residual is None else residual.reshape(M, cout)
    y2 = bn_affine_apply(out2, scale, shift, relu=relu, residual=res2)
    return y2.reshape(N, Ho, Wo, cout)


def maxpool_3x3_s2_p1(x):
    """3x3/s2/p1 max-pool as a fused XLA slice-max tree (single pass over the
    padded activation; the previous Pallas version materialized a 9x-stacked
    tensor in HBM)."""
    N, H, W, C = x.shape
    Ho = (H + 2 - 3) // 2 + 1
    Wo = (W + 2 - 3) // 2 + 1
    xp = jnp.pad(x, ((0, 0), (1, 1), (1, 1), (0, 0)),
                 constant_values=-jnp.inf)
    out = None
    for i in range(3):
        for j in range(3):
            v = xp[:, i:i + 2 * Ho:2, j:j + 2 * Wo:2, :]
            out = v if out is None else jnp.maximum(out, v)
    return out


def dual_head_softmax(feat, w1, b1, w2, b2):
    """feat:(B,2048) f32; both heads (Linear + Softmax) in ONE pallas_call."""
    B = feat.shape[0]
    n1, n2 = w1.shape[1], w2.shape[1]
    full = lambda shape: pl.BlockSpec(shape, lambda i: (0, 0))
    return pl.pallas_call(
        _dual_head_kernel,
        out_shape=(jax.ShapeDtypeStruct((B, n1), jnp.float32),
                   jax.ShapeDtypeStruct((B, n2), jnp.float32)),
        grid_spec=pltpu.PrefetchScalarGridSpec(
            num_scalar_prefetch=0, grid=(1,),
            in_specs=[full(feat.shape), full(w1.shape), full(b1.shape),
                      full(w2.shape), full(b2.shape)],
            out_specs=[full((B, n1)), full((B, n2))]),
        compiler_params=pltpu.CompilerParams(dimension_semantics=("arbitrary",)),
    )(feat, w1, b1, w2, b2)


# -----------------------------------------------------------------------------
# Parameter init (deterministic; mirrors the module's __init__ init scheme)
# -----------------------------------------------------------------------------
def _xavier_uniform(key, shape, fan_in, fan_out):
    bound = math.sqrt(6.0 / (fan_in + fan_out))
    return jax.random.uniform(key, shape, jnp.float32, -bound, bound)


def init_params(key):
    keys = iter(jax.random.split(key, 64))

    def conv_w(cout, cin, kh, kw):
        # xavier_uniform_ on the OIHW tensor, reshaped ONCE to the
        # (kh*kw*cin, cout) bf16 GEMM operand.
        w = _xavier_uniform(next(keys), (cout, cin, kh, kw),
                            cin * kh * kw, cout * kh * kw)
        w2d = jnp.transpose(w, (2, 3, 1, 0)).reshape(kh * kw * cin, cout)
        return {'w': w2d.astype(jnp.bfloat16), 'kh': kh, 'kw': kw}

    def bn_p(c):  # BN weight=1, bias=0 per the module init
        return (jnp.ones((c,), jnp.float32), jnp.zeros((c,), jnp.float32))

    params = {'conv1': conv_w(64, 3, 7, 7), 'bn1': bn_p(64)}
    inplanes = 64
    for li, (planes, blocks, stride) in enumerate(LAYER_CFG):
        for bi in range(blocks):
            blk = {
                'conv1': conv_w(planes, inplanes, 1, 1), 'bn1': bn_p(planes),
                'conv2': conv_w(planes, planes, 3, 3), 'bn2': bn_p(planes),
                'conv3': conv_w(planes * 4, planes, 1, 1),
                'bn3': bn_p(planes * 4),
            }
            if bi == 0:  # downsample branch on the first block of each stage
                blk['down_conv'] = conv_w(planes * 4, inplanes, 1, 1)
                blk['down_bn'] = bn_p(planes * 4)
            params[f'layer{li + 1}_{bi}'] = blk
            inplanes = planes * 4

    n1, n2 = len(PSI), int(sum(PSI))
    w1 = _xavier_uniform(next(keys), (n1, 2048), 2048, n1)
    w2 = _xavier_uniform(next(keys), (n2, 2048), 2048, n2)
    params['cls1_w'] = w1.T                                 # (2048, n1) f32
    params['cls1_b'] = jnp.zeros((1, n1), jnp.float32)
    params['cls2_w'] = w2.T                                 # (2048, n2) f32
    params['cls2_b'] = jnp.zeros((1, n2), jnp.float32)
    return params


# -----------------------------------------------------------------------------
# Forward pass (ResNet-50 backbone features + two softmax heads)
# -----------------------------------------------------------------------------
def resnet50_maxl_forward(params, x_nchw):
    x = jnp.transpose(x_nchw, (0, 2, 3, 1)).astype(jnp.bfloat16)  # NCHW -> NHWC
    x = conv_bn_act(x, params['conv1'], params['bn1'], stride=2, pad=3, relu=True)
    x = maxpool_3x3_s2_p1(x)

    for li, (planes, blocks, stride) in enumerate(LAYER_CFG):
        for bi in range(blocks):
            blk = params[f'layer{li + 1}_{bi}']
            s = stride if bi == 0 else 1
            identity = x
            out = conv_bn_act(x, blk['conv1'], blk['bn1'],
                              stride=1, pad=0, relu=True)
            out = conv_bn_act(out, blk['conv2'], blk['bn2'],
                              stride=s, pad=1, relu=True)
            if 'down_conv' in blk:
                identity = conv_bn_act(identity, blk['down_conv'], blk['down_bn'],
                                       stride=s, pad=0, relu=False)
            # conv3 + bn3 + residual add + ReLU: one GEMM + one fused apply kernel
            x = conv_bn_act(out, blk['conv3'], blk['bn3'],
                            stride=1, pad=0, relu=True, residual=identity)

    # Global average pool (AdaptiveAvgPool2d((1,1))) + flatten -> (N, 2048), f32.
    feat = jnp.mean(x.astype(jnp.float32), axis=(1, 2))

    t1_pred, t2_pred = dual_head_softmax(feat, params['cls1_w'], params['cls1_b'],
                                         params['cls2_w'], params['cls2_b'])
    return t1_pred, t2_pred


if __name__ == "__main__":
    key = jax.random.PRNGKey(0)
    pkey, xkey = jax.random.split(key)
    params = init_params(pkey)
    x = jax.random.normal(xkey, (2, 3, 32, 32), jnp.float32)  # NCHW like PyTorch
    t1, t2 = resnet50_maxl_forward(params, x)
    jax.block_until_ready((t1, t2))
    assert t1.shape == (2, 100) and t2.shape == (2, 500)
    assert bool(jnp.all(jnp.isfinite(t1))) and bool(jnp.all(jnp.isfinite(t2)))
    print("KERNEL_OK")
</pallas_src>

<mosaic_0001>
module attributes {stable_mosaic.version = 11 : i64} {
  func.func @_matmul_stats_single_k_kernel(%arg0: i32, %arg1: i32, %arg2: i32, %arg3: memref<256x147xbf16, #tpu.memory_space<vmem>>, %arg4: memref<147x64xbf16, #tpu.memory_space<vmem>>, %arg5: memref<256x64xbf16, #tpu.memory_space<vmem>>, %arg6: memref<8x64xf32, #tpu.memory_space<vmem>>) attributes {dimension_semantics = [#tpu.dimension_semantics<parallel>, #tpu.dimension_semantics<parallel>, #tpu.dimension_semantics<arbitrary>], iteration_bounds = array<i64: 2, 1, 1>, scalar_prefetch = 0 : i64, scratch_operands = 0 : i64, tpu.core_type = #tpu.core_type<tc>, window_params = [{transform_indices = @transform_0, window_bounds = array<i64: 256, 147>}, {transform_indices = @transform_1, window_bounds = array<i64: 147, 64>}, {transform_indices = @transform_2, window_bounds = array<i64: 256, 64>}, {transform_indices = @transform_3, window_bounds = array<i64: 8, 64>}]} {
    %c0 = arith.constant 0 : index
    %c0_0 = arith.constant 0 : index
    %0 = vector.load %arg3[%c0, %c0_0] : memref<256x147xbf16, #tpu.memory_space<vmem>>, vector<256x147xbf16>
    %c0_1 = arith.constant 0 : index
    %c0_2 = arith.constant 0 : index
    %1 = vector.load %arg4[%c0_1, %c0_2] : memref<147x64xbf16, #tpu.memory_space<vmem>>, vector<147x64xbf16>
    %cst = arith.constant dense<0.000000e+00> : vector<256x64xf32>
    %2 = tpu.matmul %0, %1, %cst {dimension_numbers = #tpu.dot_dimension_numbers<[1], [0], [0], [1], [0, 0, 1, 1], [], []>} : vector<256x147xbf16>, vector<147x64xbf16>, vector<256x64xf32> -> vector<256x64xf32>
    %3 = arith.truncf %2 : vector<256x64xf32> to vector<256x64xbf16>
    %c0_3 = arith.constant 0 : index
    %c0_4 = arith.constant 0 : index
    %4 = vector.load %arg5[%c0_3, %c0_4] : memref<256x64xbf16, #tpu.memory_space<vmem>>, vector<256x64xbf16>
    tpu.vector_store %arg5[%c0_3, %c0_4], %3 {strides = array<i32>} : memref<256x64xbf16, #tpu.memory_space<vmem>>, vector<256x64xbf16>,
    %cst_5 = arith.constant dense<0.000000e+00> : vector<64xf32>
    %5 = vector.multi_reduction <add>, %2, %cst_5 [0] : vector<256x64xf32> to vector<64xf32>
    %6 = vector.shape_cast %5 : vector<64xf32> to vector<1x64xf32>
    %7 = arith.mulf %2, %2 : vector<256x64xf32>
    %cst_6 = arith.constant dense<0.000000e+00> : vector<64xf32>
    %8 = vector.multi_reduction <add>, %7, %cst_6 [0] : vector<256x64xf32> to vector<64xf32>
    %9 = vector.shape_cast %8 : vector<64xf32> to vector<1x64xf32>
    %10 = tpu.iota {dimensions = array<i32: 0>} : vector<8x64xi32>
    %c0_i32 = arith.constant 0 : i32
    %11 = vector.broadcast %c0_i32 : i32 to vector<8x64xi32>
    %12 = arith.cmpi eq, %10, %11 : vector<8x64xi32>
    %c1_i32 = arith.constant 1 : i32
    %13 = vector.broadcast %c1_i32 : i32 to vector<8x64xi32>
    %14 = arith.cmpi eq, %10, %13 : vector<8x64xi32>
    %cst_7 = arith.constant 0.000000e+00 : f32
    %15 = vector.shape_cast %9 : vector<1x64xf32> to vector<1x64xf32>
    %16 = vector.broadcast %15 : vector<1x64xf32> to vector<8x64xf32>
    %17 = vector.broadcast %cst_7 : f32 to vector<8x64xf32>
    %18 = arith.select %14, %16, %17 : vector<8x64xi1>, vector<8x64xf32>
    %19 = vector.shape_cast %6 : vector<1x64xf32> to vector<1x64xf32>
    %20 = vector.broadcast %19 : vector<1x64xf32> to vector<8x64xf32>
    %21 = arith.select %12, %20, %18 : vector<8x64xi1>, vector<8x64xf32>
    %c0_8 = arith.constant 0 : index
    %c0_9 = arith.constant 0 : index
    %22 = vector.load %arg6[%c0_8, %c0_9] : memref<8x64xf32, #tpu.memory_space<vmem>>, vector<8x64xf32>
    tpu.vector_store %arg6[%c0_8, %c0_9], %21 {strides = array<i32>} : memref<8x64xf32, #tpu.memory_space<vmem>>, vector<8x64xf32>,
    return
  }
  func.func @transform_0(%arg0: i32, %arg1: i32, %arg2: i32) -> (i32, i32) {
    %c0_i32 = arith.constant 0 : i32
    return %arg0, %arg2 : i32, i32
  }
  func.func @transform_1(%arg0: i32, %arg1: i32, %arg2: i32) -> (i32, i32) {
    %c0_i32 = arith.constant 0 : i32
    return %arg2, %arg1 : i32, i32
  }
  func.func @transform_2(%arg0: i32, %arg1: i32, %arg2: i32) -> (i32, i32) {
    %c0_i32 = arith.constant 0 : i32
    return %arg0, %arg1 : i32, i32
  }
  func.func @transform_3(%arg0: i32, %arg1: i32, %arg2: i32) -> (i32, i32) {
    %c0_i32 = arith.constant 0 : i32
    return %arg0, %arg1 : i32, i32
  }
}

</mosaic_0001>

<llo_original>
// kernel: tpu_custom_call.1
$region0: #{tpu_custom_call.1}
  #allocation0 [shape = 'u32[]', space=smem, size = 0x4, offset = 0x4, fixed_abs, tag = 'smem constant byte address 0x4 - core index']
  #allocation1 [shape = 'u32[144,128]{1,0:T(1,128)}', space=vmem, size = 0x12000, scoped, tag = 'internal scratch']
  %s0 = inlined_call_operand.vmem [shape: bf16[512,147], index: 0, kind: input, shape index: {}]
  %s1 = inlined_call_operand.vmem [shape: bf16[147,64], index: 1, kind: input, shape index: {}]
  %s2 = inlined_call_operand.vmem [shape: bf16[512,64], index: 2, kind: output, shape index: {0}]
  %s3 = inlined_call_operand.hbm [shape: f32[16,64], index: 3, kind: output, shape index: {1}]
  %4 = xla_tuple %s2, %s3
  %s5 = sld [smem:[#allocation0]]
  $region49: #{tpu_custom_call.1} parent=0
    _
  %s7 = ssub.s32 1, %s5
  %s8 = scalar_select 0, %s7, %s5
  $region1: #{tpu_custom_call.1} parent=0
    #allocation2 [shape = 'u8[8192]{0}', space=vmem, size = 0x2000, scoped, tag = 'output window, operand 1']
    #allocation3 [shape = 's32[2]{0}', space=sflag, size = 0x8, scoped, tag = 'scoped memory for tpu_custom_call.1']
    %9 = vsyncpa [#allocation3], 0
    %s10 = scalar_lea.sflag [#allocation3], 1
    %11 = vsyncpa %s10, 0
    loop: start=0, step=1, limit=4
    $region2: #{tpu_custom_call.1} parent=1 // loop_pre_header
      _
    $region3: #{tpu_custom_call.1} parent=1 // loop_header
      %s13 = sphi 0, %s17
      %p14 = scmp.ge.s32.totalorder %s13, 4
      %s20 = sphi 0, %s39
      %s21 = sphi 0, %s35
      %s22 = sphi 0, %s31
      %s23 = sphi 0, %s20
      %s24 = sphi 0, %s21
      %s25 = sphi 0, %s22
      %s26 = sphi 0, %s23
      %s27 = sphi 0, %s24
      %s28 = sphi 0, %s25
      %s44 = sphi 0, %s46
      %s47 = sphi 0, %s44
      %s48 = sphi 0, %s47
      %s64 = sphi 0, %s48
      %s72 = sphi 0, %s74
      %s75 = sphi 0, %s72
      %s76 = sphi 0, %s75
      %s92 = sphi 0, %s76
      %s100 = sphi 0, %s102
      %s103 = sphi 0, %s100
      %s104 = sphi 0, %s103
      %s120 = sphi 0, %s104
      %s128 = sphi 0, %s130
      %s131 = sphi 0, %s128
      %s132 = sphi 0, %s131
      %s148 = sphi 0, %s132
    $region4: #{tpu_custom_call.1} parent=1 // loop_header_branch
      %16 = sbr.rel (%p14) target = $region8
    $region5: #{tpu_custom_call.1} parent=1 // loop_body
      %s18 = ssub.s32 %s13, 1
      %s19 = ssub.s32 %s13, 2
      %s29 = sadd.s32 1, %s22
      %p30 = scmp.ge.s32.totalorder %s29, 1
      %s31 = scalar_select %p30, 0, %s29
      %s32 = sadd.s32 1, %s21
      %s33 = scalar_select %p30, %s32, %s21
      %p34 = scmp.ge.s32.totalorder %s33, 1
      %s35 = scalar_select %p34, 0, %s33
      %s36 = sadd.s32 1, %s20
      %s37 = scalar_select %p34, %s36, %s20
      %p38 = scmp.ge.s32.totalorder %s37, 2
      %s39 = scalar_select %p38, 0, %s37
      %s40 = ssub.s32 %s20, %s39
      %s41 = ssub.s32 %s22, %s31
      %s42 = sor.u32 %s40, %s41
      %p43 = scmp.eq.s32.totalorder %s42, 0
      %s45 = sadd.s32 %s44, 1
      %s46 = scalar_select %p43, %s44, %s45
      %p49 = pneg %p43
      %p50 = scmp.eq.s32.totalorder %s13, 1
      %p51 = por %p49, %p50
      %p52 = scmp.ne.s32.totalorder %s44, %s47
      %p53 = scmp.eq.s32.totalorder %s13, 0
      %p54 = por %p52, %p53
      %p55 = scmp.ne.s32.totalorder %s44, %s47
      %p56 = scmp.eq.s32.totalorder %s18, 1
      %p57 = por %p55, %p56
      %p58 = scmp.ne.s32.totalorder %s47, %s48
      %p59 = scmp.eq.s32.totalorder %s18, 0
      %p60 = por %p58, %p59
      %p61 = scmp.ne.s32.totalorder %s47, %s48
      %p62 = scmp.eq.s32.totalorder %s19, 1
      %p63 = por %p61, %p62
      %p65 = scmp.ne.s32.totalorder %s48, %s64
      %p66 = scmp.eq.s32.totalorder %s19, 0
      %p67 = por %p65, %p66
      %s68 = ssub.s32 %s22, %s31
      %s69 = ssub.s32 %s21, %s35
      %s70 = sor.u32 %s68, %s69
      %p71 = scmp.eq.s32.totalorder %s70, 0
      %s73 = sadd.s32 %s72, 1
      %s74 = scalar_select %p71, %s72, %s73
      %p77 = pneg %p71
      %p78 = scmp.eq.s32.totalorder %s13, 1
      %p79 = por %p77, %p78
      %p80 = scmp.ne.s32.totalorder %s72, %s75
      %p81 = scmp.eq.s32.totalorder %s13, 0
      %p82 = por %p80, %p81
      %p83 = scmp.ne.s32.totalorder %s72, %s75
      %p84 = scmp.eq.s32.totalorder %s18, 1
      %p85 = por %p83, %p84
      %p86 = scmp.ne.s32.totalorder %s75, %s76
      %p87 = scmp.eq.s32.totalorder %s18, 0
      %p88 = por %p86, %p87
      %p89 = scmp.ne.s32.totalorder %s75, %s76
      %p90 = scmp.eq.s32.totalorder %s19, 1
      %p91 = por %p89, %p90
      %p93 = scmp.ne.s32.totalorder %s76, %s92
      %p94 = scmp.eq.s32.totalorder %s19, 0
      %p95 = por %p93, %p94
      %s96 = ssub.s32 %s20, %s39
      %s97 = ssub.s32 %s21, %s35
      %s98 = sor.u32 %s96, %s97
      %p99 = scmp.eq.s32.totalorder %s98, 0
      %s101 = sadd.s32 %s100, 1
      %s102 = scalar_select %p99, %s100, %s101
      %p105 = pneg %p99
      %p106 = scmp.eq.s32.totalorder %s13, 1
      %p107 = por %p105, %p106
      %p108 = scmp.ne.s32.totalorder %s100, %s103
      %p109 = scmp.eq.s32.totalorder %s13, 0
      %p110 = por %p108, %p109
      %p111 = scmp.ne.s32.totalorder %s100, %s103
      %p112 = scmp.eq.s32.totalorder %s18, 1
      %p113 = por %p111, %p112
      %p114 = scmp.ne.s32.totalorder %s103, %s104
      %p115 = scmp.eq.s32.totalorder %s18, 0
      %p116 = por %p114, %p115
      %p117 = scmp.ne.s32.totalorder %s103, %s104
      %p118 = scmp.eq.s32.totalorder %s19, 1
      %p119 = por %p117, %p118
      %p121 = scmp.ne.s32.totalorder %s104, %s120
      %p122 = scmp.eq.s32.totalorder %s19, 0
      %p123 = por %p121, %p122
      %s124 = ssub.s32 %s20, %s39
      %s125 = ssub.s32 %s21, %s35
      %s126 = sor.u32 %s124, %s125
      %p127 = scmp.eq.s32.totalorder %s126, 0
      %s129 = sadd.s32 %s128, 1
      %s130 = scalar_select %p127, %s128, %s129
      %p133 = pneg %p127
      %p134 = scmp.eq.s32.totalorder %s13, 1
      %p135 = por %p133, %p134
      %p136 = scmp.ne.s32.totalorder %s128, %s131
      %p137 = scmp.eq.s32.totalorder %s13, 0
      %p138 = por %p136, %p137
      %p139 = scmp.ne.s32.totalorder %s128, %s131
      %p140 = scmp.eq.s32.totalorder %s18, 1
      %p141 = por %p139, %p140
      %p142 = scmp.ne.s32.totalorder %s131, %s132
      %p143 = scmp.eq.s32.totalorder %s18, 0
      %p144 = por %p142, %p143
      %p145 = scmp.ne.s32.totalorder %s131, %s132
      %p146 = scmp.eq.s32.totalorder %s19, 1
      %p147 = por %p145, %p146
      %p149 = scmp.ne.s32.totalorder %s132, %s148
      %p150 = scmp.eq.s32.totalorder %s19, 0
      %p151 = por %p149, %p150
      %p152 = scmp.le.s32.totalorder 1, %s13
      %p153 = scmp.lt.s32.totalorder %s13, 3
      %p154 = pnand %p152, %p153
      %p155 = pneg %p154
      // Predicated region
      $region9: #{tpu_custom_call.1} parent=5 // pred_check
        _
      $region10: #{tpu_custom_call.1} parent=5 // pred_check_branch
        %157 = sbr.rel (%p154) target = $region12
      $region11: #{tpu_custom_call.1} parent=5 // pred_region
        %s158 = ssub.s32 %s13, 1
        // Predicated region
        $region13: #{tpu_custom_call.1} parent=11 // pred_check
          %p159 = pneg %p88
        $region14: #{tpu_custom_call.1} parent=11 // pred_check_branch
          %161 = sbr.rel (%p159) target = $region16
        $region15: #{tpu_custom_call.1} parent=11 // pred_region
          %s162 = smul.u32 19, %s25
          %p163 = scmp.lt.s32.totalorder %s162, 18
          %s164 = scalar_select %p163, %s162, 18
          %p165 = scmp.lt.s32.totalorder %s24, 0
          %s166 = scalar_select %p165, %s24, 0
          %s167 = sadd.s32 %s166, %s164
          %s168 = smul.addr %s167, 4
          %s169 = scalar_lea.vmem %s1, %s168
          %s170 = smul.u32 19, %s25
        $region16: #{tpu_custom_call.1} parent=11 // pred_fallthru
          _
      $region12: #{tpu_custom_call.1} parent=5 // pred_fallthru
        _
      %p171 = scmp.lt.s32.totalorder %s13, 2
      // Predicated region
      $region17: #{tpu_custom_call.1} parent=5 // pred_check
        %p172 = pneg %p171
      $region18: #{tpu_custom_call.1} parent=5 // pred_check_branch
        %174 = sbr.rel (%p172) target = $region20
      $region19: #{tpu_custom_call.1} parent=5 // pred_region
        // Predicated region
        $region21: #{tpu_custom_call.1} parent=19 // pred_check
          %p175 = pneg %p54
        $region22: #{tpu_custom_call.1} parent=19 // pred_check_branch
          %177 = sbr.rel (%p175) target = $region24
        $region23: #{tpu_custom_call.1} parent=19 // pred_region
          %s178 = smul.u32 32, %s20
          %s179 = smul.u32 2, %s22
          %p180 = scmp.lt.s32.totalorder %s178, 63
          %s181 = scalar_select %p180, %s178, 63
          %p182 = scmp.lt.s32.totalorder %s179, 1
          %s183 = scalar_select %p182, %s179, 1
          %s184 = smul.addr %s181, 2
          %s185 = sadd.s32 %s183, %s184
          %s186 = smul.addr %s185, 4
          %s187 = scalar_lea.vmem %s0, %s186
          %s188 = smul.u32 32, %s20
          %s189 = smul.u32 2, %s22
        $region24: #{tpu_custom_call.1} parent=19 // pred_fallthru
          _
      $region20: #{tpu_custom_call.1} parent=5 // pred_fallthru
        _
      %p190 = scmp.le.s32.totalorder 1, %s13
      %p191 = scmp.lt.s32.totalorder %s13, 3
      %p192 = pnand %p190, %p191
      %p193 = pneg %p192
      // Predicated region
      $region25: #{tpu_custom_call.1} parent=5 // pred_check
        _
      $region26: #{tpu_custom_call.1} parent=5 // pred_check_branch
        %195 = sbr.rel (%p192) target = $region28
      $region27: #{tpu_custom_call.1} parent=5 // pred_region
        %s196 = ssub.s32 %s13, 1
        %s197 = smul.u32 32, %s23
        %s198 = smul.u32 2, %s25
        %p199 = scmp.lt.s32.totalorder %s197, 63
        %s200 = scalar_select %p199, %s197, 63
        %p201 = scmp.lt.s32.totalorder %s198, 1
        %s202 = scalar_select %p201, %s198, 1
        %s203 = smul.addr %s200, 2
        %s204 = sadd.s32 %s202, %s203
        %s205 = smul.addr %s204, 4
        %s206 = scalar_lea.vmem %s0, %s205
        %p207 = pneg %p60
        %p208 = pneg %p57
        %s209 = smul.u32 19, %s25
        %p210 = scmp.lt.s32.totalorder %s209, 18
        %s211 = scalar_select %p210, %s209, 18
        %p212 = scmp.lt.s32.totalorder %s24, 0
        %s213 = scalar_select %p212, %s24, 0
        %s214 = sadd.s32 %s213, %s211
        %s215 = smul.addr %s214, 4
        %s216 = scalar_lea.vmem %s1, %s215
        %p217 = pneg %p88
        %p218 = pneg %p85
        %p219 = pneg %p116
        %p220 = pneg %p113
        %s221 = smul.u32 32, %s23
        %p222 = scmp.lt.s32.totalorder %s221, 63
        %s223 = scalar_select %p222, %s221, 63
        %p224 = scmp.lt.s32.totalorder %s24, 0
        %s225 = scalar_select %p224, %s24, 0
        %s226 = sadd.s32 %s225, %s223
        %s227 = smul.addr %s226, 4
        %s228 = scalar_lea.vmem %s2, %s227
        %p229 = pneg %p144
        %p230 = pneg %p141
        %s231 = sand.u32 %s131, 1
        %s232 = scalar_lea.sflag [#allocation3], %s231
        %s233 = sand.u32 %s131, 1
        %s234 = smul.addr %s233, 8
        %s235 = scalar_lea.vmem [#allocation2], %s234
        %s236 = smul.u32 32, %s23
        %s237 = smul.u32 2, %s25
        %p238 = scmp.lt.s32.totalorder %s236, 63
        %s239 = scalar_select %p238, %s236, 63
        %p240 = scmp.lt.s32.totalorder %s237, 1
        %s241 = scalar_select %p240, %s237, 1
        %s242 = smul.addr %s239, 2
        %s243 = sadd.s32 %s241, %s242
        %s244 = smul.addr %s243, 4
        %s245 = scalar_lea.vmem %s0, %s244
        %s246 = smul.u32 32, %s23
        %s247 = smul.u32 2, %s25
        %s248 = smul.u32 19, %s25
        %p249 = scmp.lt.s32.totalorder %s248, 18
        %s250 = scalar_select %p249, %s248, 18
        %p251 = scmp.lt.s32.totalorder %s24, 0
        %s252 = scalar_select %p251, %s24, 0
        %s253 = sadd.s32 %s252, %s250
        %s254 = smul.addr %s253, 4
        %s255 = scalar_lea.vmem %s1, %s254
        %s256 = smul.u32 19, %s25
        %s257 = smul.u32 32, %s23
        %p258 = scmp.lt.s32.totalorder %s257, 63
        %s259 = scalar_select %p258, %s257, 63
        %p260 = scmp.lt.s32.totalorder %s24, 0
        %s261 = scalar_select %p260, %s24, 0
        %s262 = sadd.s32 %s261, %s259
        %s263 = smul.addr %s262, 4
        %s264 = scalar_lea.vmem %s2, %s263
        %s265 = smul.u32 32, %s23
        %v267 = vld [vmem:[%s245] sm:$0xff]
        %v268 = vld [vmem:[%s245 + $0x8] sm:$0xff]
        %v269 = vld [vmem:[%s245 + $0x10] sm:$0xff]
        %v270 = vld [vmem:[%s245 + $0x18] sm:$0xff]
        %v271 = vld [vmem:[%s245 + $0x20] sm:$0xff]
        %v272 = vld [vmem:[%s245 + $0x28] sm:$0xff]
        %v273 = vld [vmem:[%s245 + $0x30] sm:$0xff]
        %v274 = vld [vmem:[%s245 + $0x38] sm:$0xff]
        %v275 = vld [vmem:[%s245 + $0x40] sm:$0xff]
        %v276 = vld [vmem:[%s245 + $0x48] sm:$0xff]
        %v277 = vld [vmem:[%s245 + $0x50] sm:$0xff]
        %v278 = vld [vmem:[%s245 + $0x58] sm:$0xff]
        %v279 = vld [vmem:[%s245 + $0x60] sm:$0xff]
        %v280 = vld [vmem:[%s245 + $0x68] sm:$0xff]
        %v281 = vld [vmem:[%s245 + $0x70] sm:$0xff]
        %v282 = vld [vmem:[%s245 + $0x78] sm:$0xff]
        %v283 = vld [vmem:[%s245 + $0x80] sm:$0xff]
        %v284 = vld [vmem:[%s245 + $0x88] sm:$0xff]
        %v285 = vld [vmem:[%s245 + $0x90] sm:$0xff]
        %v286 = vld [vmem:[%s245 + $0x98] sm:$0xff]
        %v287 = vld [vmem:[%s245 + $0xa0] sm:$0xff]
        %v288 = vld [vmem:[%s245 + $0xa8] sm:$0xff]
        %v289 = vld [vmem:[%s245 + $0xb0] sm:$0xff]
        %v290 = vld [vmem:[%s245 + $0xb8] sm:$0xff]
        %v291 = vld [vmem:[%s245 + $0xc0] sm:$0xff]
        %v292 = vld [vmem:[%s245 + $0xc8] sm:$0xff]
        %v293 = vld [vmem:[%s245 + $0xd0] sm:$0xff]
        %v294 = vld [vmem:[%s245 + $0xd8] sm:$0xff]
        %v295 = vld [vmem:[%s245 + $0xe0] sm:$0xff]
        %v296 = vld [vmem:[%s245 + $0xe8] sm:$0xff]
        %v297 = vld [vmem:[%s245 + $0xf0] sm:$0xff]
        %v298 = vld [vmem:[%s245 + $0xf8] sm:$0xff]
        %v299 = vld [vmem:[%s255] sm:$0xf]
        %v300 = vld [vmem:[%s255 + $0x4] sm:$0xf]
        %v301 = vld [vmem:[%s255 + $0x8] sm:$0xf]
        %v302 = vld [vmem:[%s255 + $0xc] sm:$0xf]
        %v303 = vld [vmem:[%s255 + $0x10] sm:$0xf]
        %v304 = vld [vmem:[%s255 + $0x14] sm:$0xf]
        %v305 = vld [vmem:[%s255 + $0x18] sm:$0xf]
        %v306 = vld [vmem:[%s255 + $0x1c] sm:$0xf]
        %v307 = vld [vmem:[%s255 + $0x20] sm:$0xf]
        %v308 = vld [vmem:[%s255 + $0x24] sm:$0xf]
        %v309 = vld [vmem:[%s255 + $0x28] sm:$0xf]
        %v310 = vld [vmem:[%s255 + $0x2c] sm:$0xf]
        %v311 = vld [vmem:[%s255 + $0x30] sm:$0xf]
        %v312 = vld [vmem:[%s255 + $0x34] sm:$0xf]
        %v313 = vld [vmem:[%s255 + $0x38] sm:$0xf]
        %v314 = vld [vmem:[%s255 + $0x3c] sm:$0xf]
        %v315 = vld [vmem:[%s255 + $0x40] sm:$0xf]
        %v316 = vld [vmem:[%s255 + $0x44] sm:$0xf]
        %v317 = vld [vmem:[%s255 + $0x48] sm:$0x3]
        %v350 = vunpack.c.l.b16 %v267
        %v351 = vunpack.c.h.b16 %v267
        %v352 = vunpack.c.l.b16 %v268
        %v353 = vunpack.c.h.b16 %v268
        %v354 = vunpack.c.l.b16 %v269
        %v355 = vunpack.c.h.b16 %v269
        %v356 = vunpack.c.l.b16 %v270
        %v357 = vunpack.c.h.b16 %v270
        %v358 = vunpack.c.l.b16 %v271
        %v359 = vunpack.c.h.b16 %v271
        %v360 = vunpack.c.l.b16 %v272
        %v361 = vunpack.c.h.b16 %v272
        %v362 = vunpack.c.l.b16 %v273
        %v363 = vunpack.c.h.b16 %v273
        %v364 = vunpack.c.l.b16 %v274
        %v365 = vunpack.c.h.b16 %v274
        %v366 = vunpack.c.l.b16 %v275
        %v367 = vunpack.c.h.b16 %v275
        %v368 = vunpack.c.l.b16 %v276
        %v369 = vunpack.c.h.b16 %v276
        %v370 = vunpack.c.l.b16 %v277
        %v371 = vunpack.c.h.b16 %v277
        %v372 = vunpack.c.l.b16 %v278
        %v373 = vunpack.c.h.b16 %v278
        %v374 = vunpack.c.l.b16 %v279
        %v375 = vunpack.c.h.b16 %v279
        %v376 = vunpack.c.l.b16 %v280
        %v377 = vunpack.c.h.b16 %v280
        %v378 = vunpack.c.l.b16 %v281
        %v379 = vunpack.c.h.b16 %v281
        %v380 = vunpack.c.l.b16 %v282
        %v381 = vunpack.c.h.b16 %v282
        %v382 = vunpack.c.l.b16 %v283
        %v383 = vunpack.c.h.b16 %v283
        %v384 = vunpack.c.l.b16 %v284
        %v385 = vunpack.c.h.b16 %v284
        %v386 = vunpack.c.l.b16 %v285
        %v387 = vunpack.c.h.b16 %v285
        %v388 = vunpack.c.l.b16 %v286
        %v389 = vunpack.c.h.b16 %v286
        %v390 = vunpack.c.l.b16 %v287
        %v391 = vunpack.c.h.b16 %v287
        %v392 = vunpack.c.l.b16 %v288
        %v393 = vunpack.c.h.b16 %v288
        %v394 = vunpack.c.l.b16 %v289
        %v395 = vunpack.c.h.b16 %v289
        %v396 = vunpack.c.l.b16 %v290
        %v397 = vunpack.c.h.b16 %v290
        %v398 = vunpack.c.l.b16 %v291
        %v399 = vunpack.c.h.b16 %v291
        %v400 = vunpack.c.l.b16 %v292
        %v401 = vunpack.c.h.b16 %v292
        %v402 = vunpack.c.l.b16 %v293
        %v403 = vunpack.c.h.b16 %v293
        %v404 = vunpack.c.l.b16 %v294
        %v405 = vunpack.c.h.b16 %v294
        %v406 = vunpack.c.l.b16 %v295
        %v407 = vunpack.c.h.b16 %v295
        %v408 = vunpack.c.l.b16 %v296
        %v409 = vunpack.c.h.b16 %v296
        %v410 = vunpack.c.l.b16 %v297
        %v411 = vunpack.c.h.b16 %v297
        %v412 = vunpack.c.l.b16 %v298
        %v413 = vunpack.c.h.b16 %v298
        %v414 = vpack.c.b16 %v352, %v350
        %v415 = vpack.c.b16 %v353, %v351
        %v416 = vpack.c.b16 %v356, %v354
        %v417 = vpack.c.b16 %v357, %v355
        %v418 = vpack.c.b16 %v360, %v358
        %v419 = vpack.c.b16 %v361, %v359
        %v420 = vpack.c.b16 %v364, %v362
        %v421 = vpack.c.b16 %v365, %v363
        %v422 = vpack.c.b16 %v368, %v366
        %v423 = vpack.c.b16 %v369, %v367
        %v424 = vpack.c.b16 %v372, %v370
        %v425 = vpack.c.b16 %v373, %v371
        %v426 = vpack.c.b16 %v376, %v374
        %v427 = vpack.c.b16 %v377, %v375
        %v428 = vpack.c.b16 %v380, %v378
        %v429 = vpack.c.b16 %v381, %v379
        %v430 = vpack.c.b16 %v384, %v382
        %v431 = vpack.c.b16 %v385, %v383
        %v432 = vpack.c.b16 %v388, %v386
        %v433 = vpack.c.b16 %v389, %v387
        %v434 = vpack.c.b16 %v392, %v390
        %v435 = vpack.c.b16 %v393, %v391
        %v436 = vpack.c.b16 %v396, %v394
        %v437 = vpack.c.b16 %v397, %v395
        %v438 = vpack.c.b16 %v400, %v398
        %v439 = vpack.c.b16 %v401, %v399
        %v440 = vpack.c.b16 %v404, %v402
        %v441 = vpack.c.b16 %v405, %v403
        %v442 = vpack.c.b16 %v408, %v406
        %v443 = vpack.c.b16 %v409, %v407
        %v444 = vpack.c.b16 %v412, %v410
        %v445 = vpack.c.b16 %v413, %v411
        %v481 = vunpack.c.l.b16 %v299
        %v482 = vunpack.c.l.b16 %v300
        %v483 = vunpack.c.l.b16 %v301
        %v484 = vunpack.c.l.b16 %v302
        %v485 = vunpack.c.l.b16 %v303
        %v486 = vunpack.c.l.b16 %v304
        %v487 = vunpack.c.l.b16 %v305
        %v488 = vunpack.c.l.b16 %v306
        %v489 = vunpack.c.l.b16 %v307
        %v490 = vunpack.c.l.b16 %v308
        %v491 = vunpack.c.l.b16 %v309
        %v492 = vunpack.c.l.b16 %v310
        %v493 = vunpack.c.l.b16 %v311
        %v494 = vunpack.c.l.b16 %v312
        %v495 = vunpack.c.l.b16 %v313
        %v496 = vunpack.c.l.b16 %v314
        %v497 = vunpack.c.l.b16 %v315
        %v498 = vunpack.c.l.b16 %v316
        %v499 = vunpack.c.l.b16 %v317
        %v500 = vpack.c.b16 %v482, %v481
        %v501 = vpack.c.b16 %v484, %v483
        %v502 = vpack.c.b16 %v486, %v485
        %v503 = vpack.c.b16 %v488, %v487
        %v504 = vpack.c.b16 %v490, %v489
        %v505 = vpack.c.b16 %v492, %v491
        %v506 = vpack.c.b16 %v494, %v493
        %v507 = vpack.c.b16 %v496, %v495
        %v508 = vpack.c.b16 %v498, %v497
        %v509 = vpack.c.b16 %v499, %v499
        %vm519 = vcmask 154624
        %v521 = vsel %vm519, %v415, 0
        %v524 = vsel %vm519, %v417, 0
        %v527 = vsel %vm519, %v419, 0
        %v530 = vsel %vm519, %v421, 0
        %v533 = vsel %vm519, %v423, 0
        %v536 = vsel %vm519, %v425, 0
        %v539 = vsel %vm519, %v427, 0
        %v542 = vsel %vm519, %v429, 0
        %v545 = vsel %vm519, %v431, 0
        %v548 = vsel %vm519, %v433, 0
        %v551 = vsel %vm519, %v435, 0
        %v554 = vsel %vm519, %v437, 0
        %v557 = vsel %vm519, %v439, 0
        %v560 = vsel %vm519, %v441, 0
        %v563 = vsel %vm519, %v443, 0
        %v566 = vsel %vm519, %v445, 0
        %vm568 = vcmask 1040384
        %vm569 = vcmask 1041408
        %v570 = vsel %vm568, 4294967295, 65535
        %v571 = vsel %vm569, %v570, 0
        %v573 = vand.u32 %v509, %v571
        %575 = vmatprep.subr.bf16.mxu0 0
        %576 = vmatpush1.bf16.msra.mxu0 %v507
        %577 = vmatprep.subr.bf16.mxu0 0
        %578 = vmatpush1.bf16.msra.mxu0 %v506
        %579 = vmatprep.subr.bf16.mxu0 0
        %580 = vmatpush1.bf16.msra.mxu0 %v505
        %581 = vmatprep.subr.bf16.mxu0 0
        %582 = vmatpush1.bf16.msra.mxu0 %v504
        %583 = vmatprep.subr.bf16.mxu0 0
        %584 = vmatpush1.bf16.msra.mxu0 %v503
        %585 = vmatprep.subr.bf16.mxu0 0
        %586 = vmatpush1.bf16.msra.mxu0 %v502
        %587 = vmatprep.subr.bf16.mxu0 0
        %588 = vmatpush1.bf16.msra.mxu0 %v501
        %589 = vmatprep.subr.bf16.mxu0 0
        %590 = vmatpush1.bf16.msra.mxu0 %v500
        %591 = vmatprep.subr.bf16.mxu0 0
        %592 = vmatpush2.bf16.msra.mxu0 0
        %593 = vmatprep.subr.bf16.mxu0 0
        %594 = vmatpush2.bf16.msra.mxu0 0
        %595 = vmatprep.subr.bf16.mxu0 0
        %596 = vmatpush2.bf16.msra.mxu0 0
        %597 = vmatprep.subr.bf16.mxu0 0
        %598 = vmatpush2.bf16.msra.mxu0 0
        %599 = vmatprep.subr.bf16.mxu0 0
        %600 = vmatpush2.bf16.msra.mxu0 0
        %601 = vmatprep.subr.bf16.mxu0 0
        %602 = vmatpush2.bf16.msra.mxu0 0
        %603 = vmatprep.subr.bf16.mxu0 0
        %604 = vmatpush2.bf16.msra.mxu0 %v573
        %605 = vmatprep.subr.bf16.mxu0 0
        %606 = vmatpush2.bf16.msra.mxu0 %v508
        %607 = vmatprep.mubr.bf16.mxu0 %v521
        %608 = vmatmul.mubr.bf16.gmra.mxu0 %v414
        %v609 = vpop.f32.mrf.mxu0
        %v610 = vadd.f32 0.0, %v609
        %v611 = vpop.f32.mrf.mxu0
        %v612 = vpop.f32.mrf.mxu0
        %v613 = vadd.f32 0.0, %v612
        %v614 = vpop.f32.mrf.mxu0
        %615 = vmatprep.mubr.bf16.mxu0 %v524
        %616 = vmatmul.mubr.bf16.gmra.mxu0 %v416
        %v617 = vpop.f32.mrf.mxu0
        %v618 = vadd.f32 0.0, %v617
        %v619 = vpop.f32.mrf.mxu0
        %v620 = vpop.f32.mrf.mxu0
        %v621 = vadd.f32 0.0, %v620
        %v622 = vpop.f32.mrf.mxu0
        %623 = vmatprep.mubr.bf16.mxu0 %v527
        %624 = vmatmul.mubr.bf16.gmra.mxu0 %v418
        %v625 = vpop.f32.mrf.mxu0
        %v626 = vadd.f32 0.0, %v625
        %v627 = vpop.f32.mrf.mxu0
        %v628 = vpop.f32.mrf.mxu0
        %v629 = vadd.f32 0.0, %v628
        %v630 = vpop.f32.mrf.mxu0
        %631 = vmatprep.mubr.bf16.mxu0 %v530
        %632 = vmatmul.mubr.bf16.gmra.mxu0 %v420
        %v633 = vpop.f32.mrf.mxu0
        %v634 = vadd.f32 0.0, %v633
        %v635 = vpop.f32.mrf.mxu0
        %v636 = vpop.f32.mrf.mxu0
        %v637 = vadd.f32 0.0, %v636
        %v638 = vpop.f32.mrf.mxu0
        %639 = vmatprep.mubr.bf16.mxu0 %v533
        %640 = vmatmul.mubr.bf16.gmra.mxu0 %v422
        %v641 = vpop.f32.mrf.mxu0
        %v642 = vadd.f32 0.0, %v641
        %v643 = vpop.f32.mrf.mxu0
        %v644 = vpop.f32.mrf.mxu0
        %v645 = vadd.f32 0.0, %v644
        %v646 = vpop.f32.mrf.mxu0
        %647 = vmatprep.mubr.bf16.mxu0 %v536
        %648 = vmatmul.mubr.bf16.gmra.mxu0 %v424
        %v649 = vpop.f32.mrf.mxu0
        %v650 = vadd.f32 0.0, %v649
        %v651 = vpop.f32.mrf.mxu0
        %v652 = vpop.f32.mrf.mxu0
        %v653 = vadd.f32 0.0, %v652
        %v654 = vpop.f32.mrf.mxu0
        %655 = vmatprep.mubr.bf16.mxu0 %v539
        %656 = vmatmul.mubr.bf16.gmra.mxu0 %v426
        %v657 = vpop.f32.mrf.mxu0
        %v658 = vadd.f32 0.0, %v657
        %v659 = vpop.f32.mrf.mxu0
        %v660 = vpop.f32.mrf.mxu0
        %v661 = vadd.f32 0.0, %v660
        %v662 = vpop.f32.mrf.mxu0
        %663 = vmatprep.mubr.bf16.mxu0 %v542
        %664 = vmatmul.mubr.bf16.gmra.mxu0 %v428
        %v665 = vpop.f32.mrf.mxu0
        %v666 = vadd.f32 0.0, %v665
        %v667 = vpop.f32.mrf.mxu0
        %v668 = vpop.f32.mrf.mxu0
        %v669 = vadd.f32 0.0, %v668
        %v670 = vpop.f32.mrf.mxu0
        %671 = vmatprep.mubr.bf16.mxu0 %v545
        %672 = vmatmul.mubr.bf16.gmra.mxu0 %v430
        %v673 = vpop.f32.mrf.mxu0
        %v674 = vadd.f32 0.0, %v673
        %v675 = vpop.f32.mrf.mxu0
        %v676 = vpop.f32.mrf.mxu0
        %v677 = vadd.f32 0.0, %v676
        %v678 = vpop.f32.mrf.mxu0
        %679 = vmatprep.mubr.bf16.mxu0 %v548
        %680 = vmatmul.mubr.bf16.gmra.mxu0 %v432
        %v681 = vpop.f32.mrf.mxu0
        %v682 = vadd.f32 0.0, %v681
        %v683 = vpop.f32.mrf.mxu0
        %v684 = vpop.f32.mrf.mxu0
        %v685 = vadd.f32 0.0, %v684
        %v686 = vpop.f32.mrf.mxu0
        %687 = vmatprep.mubr.bf16.mxu0 %v551
        %688 = vmatmul.mubr.bf16.gmra.mxu0 %v434
        %v689 = vpop.f32.mrf.mxu0
        %v690 = vadd.f32 0.0, %v689
        %v691 = vpop.f32.mrf.mxu0
        %v692 = vpop.f32.mrf.mxu0
        %v693 = vadd.f32 0.0, %v692
        %v694 = vpop.f32.mrf.mxu0
        %695 = vmatprep.mubr.bf16.mxu0 %v554
        %696 = vmatmul.mubr.bf16.gmra.mxu0 %v436
        %v697 = vpop.f32.mrf.mxu0
        %v698 = vadd.f32 0.0, %v697
        %v699 = vpop.f32.mrf.mxu0
        %v700 = vpop.f32.mrf.mxu0
        %v701 = vadd.f32 0.0, %v700
        %v702 = vpop.f32.mrf.mxu0
        %703 = vmatprep.mubr.bf16.mxu0 %v557
        %704 = vmatmul.mubr.bf16.gmra.mxu0 %v438
        %v705 = vpop.f32.mrf.mxu0
        %v706 = vadd.f32 0.0, %v705
        %v707 = vpop.f32.mrf.mxu0
        %v708 = vpop.f32.mrf.mxu0
        %v709 = vadd.f32 0.0, %v708
        %v710 = vpop.f32.mrf.mxu0
        %711 = vmatprep.mubr.bf16.mxu0 %v560
        %712 = vmatmul.mubr.bf16.gmra.mxu0 %v440
        %v713 = vpop.f32.mrf.mxu0
        %v714 = vadd.f32 0.0, %v713
        %v715 = vpop.f32.mrf.mxu0
        %v716 = vpop.f32.mrf.mxu0
        %v717 = vadd.f32 0.0, %v716
        %v718 = vpop.f32.mrf.mxu0
        %719 = vmatprep.mubr.bf16.mxu0 %v563
        %720 = vmatmul.mubr.bf16.gmra.mxu0 %v442
        %v721 = vpop.f32.mrf.mxu0
        %v722 = vadd.f32 0.0, %v721
        %v723 = vpop.f32.mrf.mxu0
        %v724 = vpop.f32.mrf.mxu0
        %v725 = vadd.f32 0.0, %v724
        %v726 = vpop.f32.mrf.mxu0
        %727 = vmatprep.mubr.bf16.mxu0 %v566
        %728 = vmatmul.mubr.bf16.gmra.mxu0 %v444
        %v729 = vpop.f32.mrf.mxu0
        %v730 = vadd.f32 0.0, %v729
        %v731 = vpop.f32.mrf.mxu0
        %v732 = vpop.f32.mrf.mxu0
        %v733 = vadd.f32 0.0, %v732
        %v734 = vpop.f32.mrf.mxu0
        %735 = vdwg.mxu0
        %v736 = vpack.c.bf16 %v613, %v610
        %v737 = vpack.c.bf16 %v621, %v618
        %v738 = vpack.c.bf16 %v629, %v626
        %v739 = vpack.c.bf16 %v637, %v634
        %v740 = vpack.c.bf16 %v645, %v642
        %v741 = vpack.c.bf16 %v653, %v650
        %v742 = vpack.c.bf16 %v661, %v658
        %v743 = vpack.c.bf16 %v669, %v666
        %v744 = vpack.c.bf16 %v677, %v674
        %v745 = vpack.c.bf16 %v685, %v682
        %v746 = vpack.c.bf16 %v693, %v690
        %v747 = vpack.c.bf16 %v701, %v698
        %v748 = vpack.c.bf16 %v709, %v706
        %v749 = vpack.c.bf16 %v717, %v714
        %v750 = vpack.c.bf16 %v725, %v722
        %v751 = vpack.c.bf16 %v733, %v730
        %v768 = vunpack.c.l.b16 %v736
        %v769 = vunpack.c.h.b16 %v736
        %v770 = vunpack.c.l.b16 %v737
        %v771 = vunpack.c.h.b16 %v737
        %v772 = vunpack.c.l.b16 %v738
        %v773 = vunpack.c.h.b16 %v738
        %v774 = vunpack.c.l.b16 %v739
        %v775 = vunpack.c.h.b16 %v739
        %v776 = vunpack.c.l.b16 %v740
        %v777 = vunpack.c.h.b16 %v740
        %v778 = vunpack.c.l.b16 %v741
        %v779 = vunpack.c.h.b16 %v741
        %v780 = vunpack.c.l.b16 %v742
        %v781 = vunpack.c.h.b16 %v742
        %v782 = vunpack.c.l.b16 %v743
        %v783 = vunpack.c.h.b16 %v743
        %v784 = vunpack.c.l.b16 %v744
        %v785 = vunpack.c.h.b16 %v744
        %v786 = vunpack.c.l.b16 %v745
        %v787 = vunpack.c.h.b16 %v745
        %v788 = vunpack.c.l.b16 %v746
        %v789 = vunpack.c.h.b16 %v746
        %v790 = vunpack.c.l.b16 %v747
        %v791 = vunpack.c.h.b16 %v747
        %v792 = vunpack.c.l.b16 %v748
        %v793 = vunpack.c.h.b16 %v748
        %v794 = vunpack.c.l.b16 %v749
        %v795 = vunpack.c.h.b16 %v749
        %v796 = vunpack.c.l.b16 %v750
        %v797 = vunpack.c.h.b16 %v750
        %v798 = vunpack.c.l.b16 %v751
        %v799 = vunpack.c.h.b16 %v751
        %v800 = vpack.c.b16 %v768, %v768
        %v801 = vpack.c.b16 %v769, %v769
        %v802 = vpack.c.b16 %v770, %v770
        %v803 = vpack.c.b16 %v771, %v771
        %v804 = vpack.c.b16 %v772, %v772
        %v805 = vpack.c.b16 %v773, %v773
        %v806 = vpack.c.b16 %v774, %v774
        %v807 = vpack.c.b16 %v775, %v775
        %v808 = vpack.c.b16 %v776, %v776
        %v809 = vpack.c.b16 %v777, %v777
        %v810 = vpack.c.b16 %v778, %v778
        %v811 = vpack.c.b16 %v779, %v779
        %v812 = vpack.c.b16 %v780, %v780
        %v813 = vpack.c.b16 %v781, %v781
        %v814 = vpack.c.b16 %v782, %v782
        %v815 = vpack.c.b16 %v783, %v783
        %v816 = vpack.c.b16 %v784, %v784
        %v817 = vpack.c.b16 %v785, %v785
        %v818 = vpack.c.b16 %v786, %v786
        %v819 = vpack.c.b16 %v787, %v787
        %v820 = vpack.c.b16 %v788, %v788
        %v821 = vpack.c.b16 %v789, %v789
        %v822 = vpack.c.b16 %v790, %v790
        %v823 = vpack.c.b16 %v791, %v791
        %v824 = vpack.c.b16 %v792, %v792
        %v825 = vpack.c.b16 %v793, %v793
        %v826 = vpack.c.b16 %v794, %v794
        %v827 = vpack.c.b16 %v795, %v795
        %v828 = vpack.c.b16 %v796, %v796
        %v829 = vpack.c.b16 %v797, %v797
        %v830 = vpack.c.b16 %v798, %v798
        %v831 = vpack.c.b16 %v799, %v799
        %vm864 = vcmask 519168
        %865 = vst.msk [vmem:[%s264] sm:$0xf] %vm864, %v800
        %866 = vst.msk [vmem:[%s264 + $0x4] sm:$0xf] %vm864, %v801
        %867 = vst.msk [vmem:[%s264 + $0x8] sm:$0xf] %vm864, %v802
        %868 = vst.msk [vmem:[%s264 + $0xc] sm:$0xf] %vm864, %v803
        %869 = vst.msk [vmem:[%s264 + $0x10] sm:$0xf] %vm864, %v804
        %870 = vst.msk [vmem:[%s264 + $0x14] sm:$0xf] %vm864, %v805
        %871 = vst.msk [vmem:[%s264 + $0x18] sm:$0xf] %vm864, %v806
        %872 = vst.msk [vmem:[%s264 + $0x1c] sm:$0xf] %vm864, %v807
        %873 = vst.msk [vmem:[%s264 + $0x20] sm:$0xf] %vm864, %v808
        %874 = vst.msk [vmem:[%s264 + $0x24] sm:$0xf] %vm864, %v809
        %875 = vst.msk [vmem:[%s264 + $0x28] sm:$0xf] %vm864, %v810
        %876 = vst.msk [vmem:[%s264 + $0x2c] sm:$0xf] %vm864, %v811
        %877 = vst.msk [vmem:[%s264 + $0x30] sm:$0xf] %vm864, %v812
        %878 = vst.msk [vmem:[%s264 + $0x34] sm:$0xf] %vm864, %v813
        %879 = vst.msk [vmem:[%s264 + $0x38] sm:$0xf] %vm864, %v814
        %880 = vst.msk [vmem:[%s264 + $0x3c] sm:$0xf] %vm864, %v815
        %881 = vst.msk [vmem:[%s264 + $0x40] sm:$0xf] %vm864, %v816
        %882 = vst.msk [vmem:[%s264 + $0x44] sm:$0xf] %vm864, %v817
        %883 = vst.msk [vmem:[%s264 + $0x48] sm:$0xf] %vm864, %v818
        %884 = vst.msk [vmem:[%s264 + $0x4c] sm:$0xf] %vm864, %v819
        %885 = vst.msk [vmem:[%s264 + $0x50] sm:$0xf] %vm864, %v820
        %886 = vst.msk [vmem:[%s264 + $0x54] sm:$0xf] %vm864, %v821
        %887 = vst.msk [vmem:[%s264 + $0x58] sm:$0xf] %vm864, %v822
        %888 = vst.msk [vmem:[%s264 + $0x5c] sm:$0xf] %vm864, %v823
        %889 = vst.msk [vmem:[%s264 + $0x60] sm:$0xf] %vm864, %v824
        %890 = vst.msk [vmem:[%s264 + $0x64] sm:$0xf] %vm864, %v825
        %891 = vst.msk [vmem:[%s264 + $0x68] sm:$0xf] %vm864, %v826
        %892 = vst.msk [vmem:[%s264 + $0x6c] sm:$0xf] %vm864, %v827
        %893 = vst.msk [vmem:[%s264 + $0x70] sm:$0xf] %vm864, %v828
        %894 = vst.msk [vmem:[%s264 + $0x74] sm:$0xf] %vm864, %v829
        %895 = vst.msk [vmem:[%s264 + $0x78] sm:$0xf] %vm864, %v830
        %896 = vst.msk [vmem:[%s264 + $0x7c] sm:$0xf] %vm864, %v831
        %vm897 = vcmask 523264
        %v898 = vsel %vm897, %v610, 0.0
        %v899 = vsel %vm897, %v613, 0.0
        %v900 = vadd.f32 %v898, %v899
        %v901 = vsel %vm897, %v618, 0.0
        %v902 = vadd.f32 %v900, %v901
        %v903 = vsel %vm897, %v621, 0.0
        %v904 = vadd.f32 %v902, %v903
        %v905 = vsel %vm897, %v626, 0.0
        %v906 = vadd.f32 %v904, %v905
        %v907 = vsel %vm897, %v629, 0.0
        %v908 = vadd.f32 %v906, %v907
        %v909 = vsel %vm897, %v634, 0.0
        %v910 = vadd.f32 %v908, %v909
        %v911 = vsel %vm897, %v637, 0.0
        %v912 = vadd.f32 %v910, %v911
        %v913 = vsel %vm897, %v642, 0.0
        %v914 = vadd.f32 %v912, %v913
        %v915 = vsel %vm897, %v645, 0.0
        %v916 = vadd.f32 %v914, %v915
        %v917 = vsel %vm897, %v650, 0.0
        %v918 = vadd.f32 %v916, %v917
        %v919 = vsel %vm897, %v653, 0.0
        %v920 = vadd.f32 %v918, %v919
        %v921 = vsel %vm897, %v658, 0.0
        %v922 = vadd.f32 %v920, %v921
        %v923 = vsel %vm897, %v661, 0.0
        %v924 = vadd.f32 %v922, %v923
        %v925 = vsel %vm897, %v666, 0.0
        %v926 = vadd.f32 %v924, %v925
        %v927 = vsel %vm897, %v669, 0.0
        %v928 = vadd.f32 %v926, %v927
        %v929 = vsel %vm897, %v674, 0.0
        %v930 = vadd.f32 %v928, %v929
        %v931 = vsel %vm897, %v677, 0.0
        %v932 = vadd.f32 %v930, %v931
        %v933 = vsel %vm897, %v682, 0.0
        %v934 = vadd.f32 %v932, %v933
        %v935 = vsel %vm897, %v685, 0.0
        %v936 = vadd.f32 %v934, %v935
        %v937 = vsel %vm897, %v690, 0.0
        %v938 = vadd.f32 %v936, %v937
        %v939 = vsel %vm897, %v693, 0.0
        %v940 = vadd.f32 %v938, %v939
        %v941 = vsel %vm897, %v698, 0.0
        %v942 = vadd.f32 %v940, %v941
        %v943 = vsel %vm897, %v701, 0.0
        %v944 = vadd.f32 %v942, %v943
        %v945 = vsel %vm897, %v706, 0.0
        %v946 = vadd.f32 %v944, %v945
        %v947 = vsel %vm897, %v709, 0.0
        %v948 = vadd.f32 %v946, %v947
        %v949 = vsel %vm897, %v714, 0.0
        %v950 = vadd.f32 %v948, %v949
        %v951 = vsel %vm897, %v717, 0.0
        %v952 = vadd.f32 %v950, %v951
        %v953 = vsel %vm897, %v722, 0.0
        %v954 = vadd.f32 %v952, %v953
        %v955 = vsel %vm897, %v725, 0.0
        %v956 = vadd.f32 %v954, %v955
        %v957 = vsel %vm897, %v730, 0.0
        %v958 = vadd.f32 %v956, %v957
        %v959 = vsel %vm897, %v733, 0.0
        %v960 = vadd.f32 %v958, %v959
        %v961 = vrot.slane %v960, 4
        %v962 = vadd.f32 %v960, %v961
        %v963 = vrot.slane %v962, 2
        %v964 = vadd.f32 %v962, %v963
        %v965 = vrot.slane %v964, 1
        %v966 = vadd.f32 %v964, %v965
        %v967 = vmul.f32 %v610, %v610
        %v968 = vmul.f32 %v613, %v613
        %v969 = vmul.f32 %v618, %v618
        %v970 = vmul.f32 %v621, %v621
        %v971 = vmul.f32 %v626, %v626
        %v972 = vmul.f32 %v629, %v629
        %v973 = vmul.f32 %v634, %v634
        %v974 = vmul.f32 %v637, %v637
        %v975 = vmul.f32 %v642, %v642
        %v976 = vmul.f32 %v645, %v645
        %v977 = vmul.f32 %v650, %v650
        %v978 = vmul.f32 %v653, %v653
        %v979 = vmul.f32 %v658, %v658
        %v980 = vmul.f32 %v661, %v661
        %v981 = vmul.f32 %v666, %v666
        %v982 = vmul.f32 %v669, %v669
        %v983 = vmul.f32 %v674, %v674
        %v984 = vmul.f32 %v677, %v677
        %v985 = vmul.f32 %v682, %v682
        %v986 = vmul.f32 %v685, %v685
        %v987 = vmul.f32 %v690, %v690
        %v988 = vmul.f32 %v693, %v693
        %v989 = vmul.f32 %v698, %v698
        %v990 = vmul.f32 %v701, %v701
        %v991 = vmul.f32 %v706, %v706
        %v992 = vmul.f32 %v709, %v709
        %v993 = vmul.f32 %v714, %v714
        %v994 = vmul.f32 %v717, %v717
        %v995 = vmul.f32 %v722, %v722
        %v996 = vmul.f32 %v725, %v725
        %v997 = vmul.f32 %v730, %v730
        %v998 = vmul.f32 %v733, %v733
        %v999 = vsel %vm897, %v967, 0.0
        %v1000 = vsel %vm897, %v968, 0.0
        %v1001 = vadd.f32 %v999, %v1000
        %v1002 = vsel %vm897, %v969, 0.0
        %v1003 = vadd.f32 %v1001, %v1002
        %v1004 = vsel %vm897, %v970, 0.0
        %v1005 = vadd.f32 %v1003, %v1004
        %v1006 = vsel %vm897, %v971, 0.0
        %v1007 = vadd.f32 %v1005, %v1006
        %v1008 = vsel %vm897, %v972, 0.0
        %v1009 = vadd.f32 %v1007, %v1008
        %v1010 = vsel %vm897, %v973, 0.0
        %v1011 = vadd.f32 %v1009, %v1010
        %v1012 = vsel %vm897, %v974, 0.0
        %v1013 = vadd.f32 %v1011, %v1012
        %v1014 = vsel %vm897, %v975, 0.0
        %v1015 = vadd.f32 %v1013, %v1014
        %v1016 = vsel %vm897, %v976, 0.0
        %v1017 = vadd.f32 %v1015, %v1016
        %v1018 = vsel %vm897, %v977, 0.0
        %v1019 = vadd.f32 %v1017, %v1018
        %v1020 = vsel %vm897, %v978, 0.0
        %v1021 = vadd.f32 %v1019, %v1020
        %v1022 = vsel %vm897, %v979, 0.0
        %v1023 = vadd.f32 %v1021, %v1022
        %v1024 = vsel %vm897, %v980, 0.0
        %v1025 = vadd.f32 %v1023, %v1024
        %v1026 = vsel %vm897, %v981, 0.0
        %v1027 = vadd.f32 %v1025, %v1026
        %v1028 = vsel %vm897, %v982, 0.0
        %v1029 = vadd.f32 %v1027, %v1028
        %v1030 = vsel %vm897, %v983, 0.0
        %v1031 = vadd.f32 %v1029, %v1030
        %v1032 = vsel %vm897, %v984, 0.0
        %v1033 = vadd.f32 %v1031, %v1032
        %v1034 = vsel %vm897, %v985, 0.0
        %v1035 = vadd.f32 %v1033, %v1034
        %v1036 = vsel %vm897, %v986, 0.0
        %v1037 = vadd.f32 %v1035, %v1036
        %v1038 = vsel %vm897, %v987, 0.0
        %v1039 = vadd.f32 %v1037, %v1038
        %v1040 = vsel %vm897, %v988, 0.0
        %v1041 = vadd.f32 %v1039, %v1040
        %v1042 = vsel %vm897, %v989, 0.0
        %v1043 = vadd.f32 %v1041, %v1042
        %v1044 = vsel %vm897, %v990, 0.0
        %v1045 = vadd.f32 %v1043, %v1044
        %v1046 = vsel %vm897, %v991, 0.0
        %v1047 = vadd.f32 %v1045, %v1046
        %v1048 = vsel %vm897, %v992, 0.0
        %v1049 = vadd.f32 %v1047, %v1048
        %v1050 = vsel %vm897, %v993, 0.0
        %v1051 = vadd.f32 %v1049, %v1050
        %v1052 = vsel %vm897, %v994, 0.0
        %v1053 = vadd.f32 %v1051, %v1052
        %v1054 = vsel %vm897, %v995, 0.0
        %v1055 = vadd.f32 %v1053, %v1054
        %v1056 = vsel %vm897, %v996, 0.0
        %v1057 = vadd.f32 %v1055, %v1056
        %v1058 = vsel %vm897, %v997, 0.0
        %v1059 = vadd.f32 %v1057, %v1058
        %v1060 = vsel %vm897, %v998, 0.0
        %v1061 = vadd.f32 %v1059, %v1060
        %v1062 = vrot.slane %v1061, 4
        %v1063 = vadd.f32 %v1061, %v1062
        %v1064 = vrot.slane %v1063, 2
        %v1065 = vadd.f32 %v1063, %v1064
        %v1066 = vrot.slane %v1065, 1
        %v1067 = vadd.f32 %v1065, %v1066
        %v1068 = vlaneseq
        %v1069 = vshrl.u32 %v1068, 7
        %vm1070 = vcmp.eq.s32.totalorder %v1069, 0
        %vm1071 = vcmp.eq.s32.totalorder %v1069, 1
        %v1072 = vsel %vm1071, %v1067, 0.0
        %v1073 = vsel %vm1070, %v966, %v1072
        %1074 = vst.msk [vmem:[%s235] sm:$0xff] %vm897, %v1073
        %s1075 = smul.u32 32, %s23
        %p1076 = scmp.lt.s32.totalorder %s1075, 63
        %s1077 = scalar_select %p1076, %s1075, 63
        %p1078 = scmp.lt.s32.totalorder %s24, 0
        %s1079 = scalar_select %p1078, %s24, 0
        %s1080 = sadd.s32 %s1079, %s1077
        %s1081 = smul.addr %s1080, 4
        %s1082 = scalar_lea.vmem %s2, %s1081
        %s1083 = sand.u32 %s131, 1
        %s1084 = scalar_lea.sflag [#allocation3], %s1083
        %s1085 = sand.u32 %s131, 1
        %s1086 = smul.addr %s1085, 8
        %s1087 = scalar_lea.vmem [#allocation2], %s1086
        // Predicated region
        $region29: #{tpu_custom_call.1} parent=27 // pred_check
          %p1088 = pneg %p113
        $region30: #{tpu_custom_call.1} parent=27 // pred_check_branch
          %1090 = sbr.rel (%p1088) target = $region32
        $region31: #{tpu_custom_call.1} parent=27 // pred_region
          %s1091 = smul.u32 32, %s23
        $region32: #{tpu_custom_call.1} parent=27 // pred_fallthru
          _
        // Predicated region
        $region33: #{tpu_custom_call.1} parent=27 // pred_check
          %p1092 = pneg %p141
        $region34: #{tpu_custom_call.1} parent=27 // pred_check_branch
          %1094 = sbr.rel (%p1092) target = $region36
        $region35: #{tpu_custom_call.1} parent=27 // pred_region
          %s1096 = ssub.s32 128, 128
          %1097 = vsyncadd %s1084, %s1096
          %s1098 = sadd.s32 %s24, %s23
          %s1099 = smul.addr %s1098, 128
          %s1100 = scalar_lea.hbm %s3, %s1099
          %s1102 = sshll.u32 %s1087, 4
          %s1103 = int_to_ptr.vmem [resolvable:$true] %s1102
          %1105 = dma.vmem_to_hbm [thread:$0]  %s1103, 128, %s1100, %s1084
        $region36: #{tpu_custom_call.1} parent=27 // pred_fallthru
          _
      $region28: #{tpu_custom_call.1} parent=5 // pred_fallthru
        _
      %p1106 = scmp.le.s32.totalorder 2, %s13
      // Predicated region
      $region37: #{tpu_custom_call.1} parent=5 // pred_check
        %p1107 = pneg %p1106
      $region38: #{tpu_custom_call.1} parent=5 // pred_check_branch
        %1109 = sbr.rel (%p1107) target = $region40
      $region39: #{tpu_custom_call.1} parent=5 // pred_region
        %s1110 = ssub.s32 %s13, 2
        // Predicated region
        $region41: #{tpu_custom_call.1} parent=39 // pred_check
          %p1111 = pneg %p119
        $region42: #{tpu_custom_call.1} parent=39 // pred_check_branch
          %1113 = sbr.rel (%p1111) target = $region44
        $region43: #{tpu_custom_call.1} parent=39 // pred_region
          %s1114 = smul.u32 32, %s26
          %p1115 = scmp.lt.s32.totalorder %s1114, 63
          %s1116 = scalar_select %p1115, %s1114, 63
          %p1117 = scmp.lt.s32.totalorder %s27, 0
          %s1118 = scalar_select %p1117, %s27, 0
          %s1119 = sadd.s32 %s1118, %s1116
          %s1120 = smul.addr %s1119, 4
          %s1121 = scalar_lea.vmem %s2, %s1120
        $region44: #{tpu_custom_call.1} parent=39 // pred_fallthru
          _
        // Predicated region
        $region45: #{tpu_custom_call.1} parent=39 // pred_check
          %p1122 = pneg %p147
        $region46: #{tpu_custom_call.1} parent=39 // pred_check_branch
          %1124 = sbr.rel (%p1122) target = $region48
        $region47: #{tpu_custom_call.1} parent=39 // pred_region
          %s1125 = sand.u32 %s132, 1
          %s1126 = scalar_lea.sflag [#allocation3], %s1125
          %s1127 = sand.u32 %s132, 1
          %s1128 = smul.addr %s1127, 8
          %s1129 = scalar_lea.vmem [#allocation2], %s1128
          %1130 = dma.done %s1126, 128
        $region48: #{tpu_custom_call.1} parent=39 // pred_fallthru
          _
      $region40: #{tpu_custom_call.1} parent=5 // pred_fallthru
        _
    $region6: #{tpu_custom_call.1} parent=1 // loop_footer
      %s17 = sadd.s32 1, %s13
    $region7: #{tpu_custom_call.1} parent=1 // loop_footer_branch
      %12 = sbr.rel target = $region3
    $region8: #{tpu_custom_call.1} parent=1 // loop_exit
      _
    %1131 = vsyncpa [#allocation3], 1
    %s1132 = scalar_lea.sflag [#allocation3], 1
    %1133 = vsyncpa %s1132, 1

</llo_original>
